<compile_context>
chip_gen: v7x
topology: tpu7x:2x2x1
jax: 0.10.0
libtpu: 0.0.40
codegen_flags: <defaults>
</compile_context>

<pallas_src>
import jax
import jax.numpy as jnp
from jax import lax
from jax.experimental import pallas as pl
from jax.experimental.pallas import tpu as pltpu


def lstm_mle_kernel(xflat_ref, h0_ref, c0_ref,
                    wih_ref, whh_ref, b_lstm_ref,
                    w1_ref, b1_ref,
                    wyt_ref, byt_ref,
                    out_ref, xg_ref):
    """Whole forward pass in one kernel invocation (everything fits in VMEM)."""
    B, H = h0_ref.shape
    TB = xflat_ref.shape[0]
    T = TB // B

    # ---- Hoisted input projection: one MXU call for all T timesteps --------
    xg_ref[...] = (jnp.dot(xflat_ref[...], wih_ref[...],
                           preferred_element_type=jnp.float32)
                   + b_lstm_ref[...])                       # (T*B, 4H)

    # ---- Serial LSTM recurrence (unrolled; per step: one (B,H)x(H,4H) dot) -
    def step(t, carry):
        h, c = carry
        row = pl.multiple_of(t * B, B)
        gates = (xg_ref[pl.ds(row, B), :]
                 + jnp.dot(h, whh_ref[...],
                           preferred_element_type=jnp.float32))   # (B, 4H)
        # Full-width activations on the whole 128-lane gates vreg, then slice.
        sig = jax.nn.sigmoid(gates)
        th = jnp.tanh(gates)
        i = sig[:, 0:H]                 # PyTorch gate order: i, f, g, o
        f = sig[:, H:2 * H]
        g = th[:, 2 * H:3 * H]
        o = sig[:, 3 * H:4 * H]
        c_new = f * c + i * g
        h_new = o * jnp.tanh(c_new)
        return (h_new, c_new)

    h_last, _c_last = lax.fori_loop(0, T, step, (h0_ref[...], c0_ref[...]),
                                    unroll=True)

    # ---- fc1 -> dropout (identity in eval) -> tanh -------------------------
    out = jnp.tanh(
        jnp.dot(h_last, w1_ref[...], preferred_element_type=jnp.float32)
        + b1_ref[...])

    # ---- Fused heads: [y_hat | tau*K | zero-pad] in one lane-dense store ---
    out_ref[...] = (jnp.dot(out, wyt_ref[...],
                            preferred_element_type=jnp.float32)
                    + byt_ref[...])


def lstm_mle_forward(x, h0, c0, params, K):
    """x: (B, T, D) float32, h0/c0: (B, H) float32."""
    wih, whh, b_lstm, w1, b1, wy, by, wt, bt = params
    B, T, D = x.shape
    H = h0.shape[1]
    F1 = w1.shape[1]
    assert 2 * D <= 128, "fused head padding assumes 2*input_dim <= 128"

    # time-major, flattened to (T*B, D) so the hoisted projection is a 2-D dot.
    x_flat = jnp.transpose(x, (1, 0, 2)).reshape(T * B, D)

    # Fuse fc_y_hat and fc_tau into one lane-dense (F1, 128) head with K folded
    # into the tau columns (tau = out @ (wt*K) + bt*K).
    OUT_COLS = 128
    wyt = jnp.zeros((F1, OUT_COLS), jnp.float32)
    wyt = wyt.at[:, 0:D].set(wy).at[:, D:2 * D].set(wt * K)
    byt = jnp.zeros((1, OUT_COLS), jnp.float32)
    byt = byt.at[:, 0:D].set(by).at[:, D:2 * D].set(bt * K)

    kernel_params = (wih, whh, b_lstm, w1, b1, wyt, byt)
    vmem = pl.BlockSpec(memory_space=pltpu.MemorySpace.VMEM)

    flops = (2 * T * B * D * 4 * H          # hoisted input projection
             + 2 * T * B * H * 4 * H        # recurrence matmuls
             + 2 * B * H * F1               # fc1
             + 2 * B * F1 * OUT_COLS)       # fused heads
    transcendentals = T * B * (2 * 4 * H + H) + B * F1
    bytes_accessed = 4 * (x_flat.size + h0.size + c0.size + B * OUT_COLS
                          + sum(int(p.size) for p in kernel_params))

    combined = pl.pallas_call(
        lstm_mle_kernel,
        out_shape=jax.ShapeDtypeStruct((B, OUT_COLS), jnp.float32),
        in_specs=[vmem] * (3 + len(kernel_params)),
        out_specs=vmem,
        scratch_shapes=[pltpu.VMEM((T * B, 4 * H), jnp.float32)],
        compiler_params=pltpu.CompilerParams(vmem_limit_bytes=4 * 1024 * 1024),
        cost_estimate=pl.CostEstimate(flops=flops,
                                      transcendentals=transcendentals,
                                      bytes_accessed=bytes_accessed),
    )(x_flat, h0, c0, *kernel_params)

    y_hat = combined[:, 0:D]
    tau = combined[:, D:2 * D]
    return y_hat, tau


def reference_forward(x, h0, c0, params, K):
    """Pure-JAX reference of the same forward pass (for correctness check)."""
    wih, whh, b_lstm, w1, b1, wy, by, wt, bt = params
    H = h0.shape[1]

    def step(carry, xt):
        h, c = carry
        g = xt @ wih + h @ whh + b_lstm[0]
        i = jax.nn.sigmoid(g[:, 0:H])
        f = jax.nn.sigmoid(g[:, H:2 * H])
        gg = jnp.tanh(g[:, 2 * H:3 * H])
        o = jax.nn.sigmoid(g[:, 3 * H:4 * H])
        c2 = f * c + i * gg
        h2 = o * jnp.tanh(c2)
        return (h2, c2), None

    (h, _c), _ = lax.scan(step, (h0, c0), jnp.transpose(x, (1, 0, 2)))
    out = jnp.tanh(h @ w1 + b1)
    return out @ wy + by, (out @ wt + bt) * K


if __name__ == "__main__":
    # Small shapes consistent with the module's forward:
    # batch=2, seq=8, input_dim=4, n_hidden_lstm=32, n_layers=1, n_hidden_fc_1=16, K=1, option=1
    B, T, D, H, F1 = 2, 8, 4, 32, 16
    K = 1

    key = jax.random.PRNGKey(0)
    keys = jax.random.split(key, 12)

    def u(k, shape, scale):
        return jax.random.uniform(k, shape, jnp.float32, -scale, scale)

    # Deterministic synthetic parameters (PyTorch-style uniform(-1/sqrt(fan), 1/sqrt(fan)))
    s_lstm = float(1.0 / jnp.sqrt(H))
    wih = u(keys[0], (D, 4 * H), s_lstm)            # weight_ih_l0 transposed
    whh = u(keys[1], (H, 4 * H), s_lstm)            # weight_hh_l0 transposed
    b_ih = u(keys[2], (4 * H,), s_lstm)
    b_hh = u(keys[3], (4 * H,), s_lstm)
    b_lstm = (b_ih + b_hh).reshape(1, 4 * H)

    s1 = float(1.0 / jnp.sqrt(H))
    w1 = u(keys[4], (H, F1), s1)                    # fc1 weight transposed
    b1 = u(keys[5], (1, F1), s1)

    s2 = float(1.0 / jnp.sqrt(F1))
    wy = u(keys[6], (F1, D), s2)                    # fc_y_hat weight transposed
    by = u(keys[7], (1, D), s2)
    wt = u(keys[8], (F1, D), s2)                    # fc_tau weight transposed
    bt = u(keys[9], (1, D), s2)

    params = (wih, whh, b_lstm, w1, b1, wy, by, wt, bt)

    # Inputs: input_data [B, T, D], hidden = (h0, c0) with n_layers=1 squeezed to (B, H)
    x = jax.random.normal(keys[10], (B, T, D), jnp.float32)
    h0 = jnp.zeros((B, H), jnp.float32)
    c0 = jnp.zeros((B, H), jnp.float32)

    # TODO(synk): dropout layers have no effect in eval mode and are implemented as identity.
    y_hat, tau = lstm_mle_forward(x, h0, c0, params, K)
    jax.block_until_ready((y_hat, tau))

    y_ref, t_ref = reference_forward(x, h0, c0, params, K)
    assert jnp.allclose(y_hat, y_ref, atol=1e-5, rtol=1e-5), "y_hat mismatch"
    assert jnp.allclose(tau, t_ref, atol=1e-5, rtol=1e-5), "tau mismatch"

    print("KERNEL_OK")
</pallas_src>

<mosaic_0001>
module attributes {stable_mosaic.version = 11 : i64} {
  func.func @lstm_mle_kernel(%arg0: memref<16x4xf32, #tpu.memory_space<vmem>>, %arg1: memref<2x32xf32, #tpu.memory_space<vmem>>, %arg2: memref<2x32xf32, #tpu.memory_space<vmem>>, %arg3: memref<4x128xf32, #tpu.memory_space<vmem>>, %arg4: memref<32x128xf32, #tpu.memory_space<vmem>>, %arg5: memref<1x128xf32, #tpu.memory_space<vmem>>, %arg6: memref<32x16xf32, #tpu.memory_space<vmem>>, %arg7: memref<1x16xf32, #tpu.memory_space<vmem>>, %arg8: memref<16x128xf32, #tpu.memory_space<vmem>>, %arg9: memref<1x128xf32, #tpu.memory_space<vmem>>, %arg10: memref<2x128xf32, #tpu.memory_space<vmem>>, %arg11: memref<16x128xf32, #tpu.memory_space<vmem>>) attributes {dimension_semantics = [], scalar_prefetch = 0 : i64, scratch_operands = 1 : i64, tpu.core_type = #tpu.core_type<tc>} {
    %c0 = arith.constant 0 : index
    %c0_0 = arith.constant 0 : index
    %0 = vector.load %arg0[%c0, %c0_0] : memref<16x4xf32, #tpu.memory_space<vmem>>, vector<16x4xf32>
    %c0_1 = arith.constant 0 : index
    %c0_2 = arith.constant 0 : index
    %1 = vector.load %arg3[%c0_1, %c0_2] : memref<4x128xf32, #tpu.memory_space<vmem>>, vector<4x128xf32>
    %cst = arith.constant dense<0.000000e+00> : vector<16x128xf32>
    %2 = tpu.matmul %0, %1, %cst {dimension_numbers = #tpu.dot_dimension_numbers<[1], [0], [0], [1], [0, 0, 1, 1], [], []>} : vector<16x4xf32>, vector<4x128xf32>, vector<16x128xf32> -> vector<16x128xf32>
    %c0_3 = arith.constant 0 : index
    %c0_4 = arith.constant 0 : index
    %3 = vector.load %arg5[%c0_3, %c0_4] : memref<1x128xf32, #tpu.memory_space<vmem>>, vector<1x128xf32>
    %4 = vector.broadcast %3 : vector<1x128xf32> to vector<16x128xf32>
    %5 = arith.addf %2, %4 : vector<16x128xf32>
    %c0_5 = arith.constant 0 : index
    %c0_6 = arith.constant 0 : index
    %6 = vector.load %arg11[%c0_5, %c0_6] : memref<16x128xf32, #tpu.memory_space<vmem>>, vector<16x128xf32>
    tpu.vector_store %arg11[%c0_5, %c0_6], %5 {strides = array<i32>} : memref<16x128xf32, #tpu.memory_space<vmem>>, vector<16x128xf32>,
    %c0_7 = arith.constant 0 : index
    %c0_8 = arith.constant 0 : index
    %7 = vector.load %arg1[%c0_7, %c0_8] : memref<2x32xf32, #tpu.memory_space<vmem>>, vector<2x32xf32>
    %c0_9 = arith.constant 0 : index
    %c0_10 = arith.constant 0 : index
    %8 = vector.load %arg2[%c0_9, %c0_10] : memref<2x32xf32, #tpu.memory_space<vmem>>, vector<2x32xf32>
    %c0_i32 = arith.constant 0 : i32
    %c2_i32 = arith.constant 2 : i32
    %9 = arith.muli %c0_i32, %c2_i32 : i32
    %10 = tpu.assume_multiple %9, 2 : i32
    %11 = arith.index_cast %10 : i32 to index
    %c0_11 = arith.constant 0 : index
    %12 = vector.load %arg11[%11, %c0_11] : memref<16x128xf32, #tpu.memory_space<vmem>>, vector<2x128xf32>
    %c0_12 = arith.constant 0 : index
    %c0_13 = arith.constant 0 : index
    %13 = vector.load %arg4[%c0_12, %c0_13] : memref<32x128xf32, #tpu.memory_space<vmem>>, vector<32x128xf32>
    %cst_14 = arith.constant dense<0.000000e+00> : vector<2x128xf32>
    %14 = tpu.matmul %7, %13, %cst_14 {dimension_numbers = #tpu.dot_dimension_numbers<[1], [0], [0], [1], [0, 0, 1, 1], [], []>} : vector<2x32xf32>, vector<32x128xf32>, vector<2x128xf32> -> vector<2x128xf32>
    %15 = arith.addf %12, %14 : vector<2x128xf32>
    %16 = arith.negf %15 : vector<2x128xf32>
    %17 = math.exp %16 : vector<2x128xf32>
    %cst_15 = arith.constant 1.000000e+00 : f32
    %18 = vector.broadcast %cst_15 : f32 to vector<2x128xf32>
    %19 = arith.addf %18, %17 : vector<2x128xf32>
    %20 = arith.divf %18, %19 : vector<2x128xf32>
    %21 = math.tanh %15 : vector<2x128xf32>
    %22 = vector.extract_strided_slice %20 {offsets = [0, 0], sizes = [2, 32], strides = [1, 1]} : vector<2x128xf32> to vector<2x32xf32>
    %23 = vector.extract_strided_slice %20 {offsets = [0, 32], sizes = [2, 32], strides = [1, 1]} : vector<2x128xf32> to vector<2x32xf32>
    %24 = vector.extract_strided_slice %21 {offsets = [0, 64], sizes = [2, 32], strides = [1, 1]} : vector<2x128xf32> to vector<2x32xf32>
    %25 = vector.extract_strided_slice %20 {offsets = [0, 96], sizes = [2, 32], strides = [1, 1]} : vector<2x128xf32> to vector<2x32xf32>
    %26 = arith.mulf %23, %8 : vector<2x32xf32>
    %27 = arith.mulf %22, %24 : vector<2x32xf32>
    %28 = arith.addf %26, %27 : vector<2x32xf32>
    %29 = math.tanh %28 : vector<2x32xf32>
    %30 = arith.mulf %25, %29 : vector<2x32xf32>
    %c1_i32 = arith.constant 1 : i32
    %c2_i32_16 = arith.constant 2 : i32
    %31 = arith.muli %c1_i32, %c2_i32_16 : i32
    %32 = tpu.assume_multiple %31, 2 : i32
    %33 = arith.index_cast %32 : i32 to index
    %c0_17 = arith.constant 0 : index
    %34 = vector.load %arg11[%33, %c0_17] : memref<16x128xf32, #tpu.memory_space<vmem>>, vector<2x128xf32>
    %c0_18 = arith.constant 0 : index
    %c0_19 = arith.constant 0 : index
    %35 = vector.load %arg4[%c0_18, %c0_19] : memref<32x128xf32, #tpu.memory_space<vmem>>, vector<32x128xf32>
    %cst_20 = arith.constant dense<0.000000e+00> : vector<2x128xf32>
    %36 = tpu.matmul %30, %35, %cst_20 {dimension_numbers = #tpu.dot_dimension_numbers<[1], [0], [0], [1], [0, 0, 1, 1], [], []>} : vector<2x32xf32>, vector<32x128xf32>, vector<2x128xf32> -> vector<2x128xf32>
    %37 = arith.addf %34, %36 : vector<2x128xf32>
    %38 = arith.negf %37 : vector<2x128xf32>
    %39 = math.exp %38 : vector<2x128xf32>
    %cst_21 = arith.constant 1.000000e+00 : f32
    %40 = vector.broadcast %cst_21 : f32 to vector<2x128xf32>
    %41 = arith.addf %40, %39 : vector<2x128xf32>
    %42 = arith.divf %40, %41 : vector<2x128xf32>
    %43 = math.tanh %37 : vector<2x128xf32>
    %44 = vector.extract_strided_slice %42 {offsets = [0, 0], sizes = [2, 32], strides = [1, 1]} : vector<2x128xf32> to vector<2x32xf32>
    %45 = vector.extract_strided_slice %42 {offsets = [0, 32], sizes = [2, 32], strides = [1, 1]} : vector<2x128xf32> to vector<2x32xf32>
    %46 = vector.extract_strided_slice %43 {offsets = [0, 64], sizes = [2, 32], strides = [1, 1]} : vector<2x128xf32> to vector<2x32xf32>
    %47 = vector.extract_strided_slice %42 {offsets = [0, 96], sizes = [2, 32], strides = [1, 1]} : vector<2x128xf32> to vector<2x32xf32>
    %48 = arith.mulf %45, %28 : vector<2x32xf32>
    %49 = arith.mulf %44, %46 : vector<2x32xf32>
    %50 = arith.addf %48, %49 : vector<2x32xf32>
    %51 = math.tanh %50 : vector<2x32xf32>
    %52 = arith.mulf %47, %51 : vector<2x32xf32>
    %c2_i32_22 = arith.constant 2 : i32
    %c2_i32_23 = arith.constant 2 : i32
    %53 = arith.muli %c2_i32_22, %c2_i32_23 : i32
    %54 = tpu.assume_multiple %53, 2 : i32
    %55 = arith.index_cast %54 : i32 to index
    %c0_24 = arith.constant 0 : index
    %56 = vector.load %arg11[%55, %c0_24] : memref<16x128xf32, #tpu.memory_space<vmem>>, vector<2x128xf32>
    %c0_25 = arith.constant 0 : index
    %c0_26 = arith.constant 0 : index
    %57 = vector.load %arg4[%c0_25, %c0_26] : memref<32x128xf32, #tpu.memory_space<vmem>>, vector<32x128xf32>
    %cst_27 = arith.constant dense<0.000000e+00> : vector<2x128xf32>
    %58 = tpu.matmul %52, %57, %cst_27 {dimension_numbers = #tpu.dot_dimension_numbers<[1], [0], [0], [1], [0, 0, 1, 1], [], []>} : vector<2x32xf32>, vector<32x128xf32>, vector<2x128xf32> -> vector<2x128xf32>
    %59 = arith.addf %56, %58 : vector<2x128xf32>
    %60 = arith.negf %59 : vector<2x128xf32>
    %61 = math.exp %60 : vector<2x128xf32>
    %cst_28 = arith.constant 1.000000e+00 : f32
    %62 = vector.broadcast %cst_28 : f32 to vector<2x128xf32>
    %63 = arith.addf %62, %61 : vector<2x128xf32>
    %64 = arith.divf %62, %63 : vector<2x128xf32>
    %65 = math.tanh %59 : vector<2x128xf32>
    %66 = vector.extract_strided_slice %64 {offsets = [0, 0], sizes = [2, 32], strides = [1, 1]} : vector<2x128xf32> to vector<2x32xf32>
    %67 = vector.extract_strided_slice %64 {offsets = [0, 32], sizes = [2, 32], strides = [1, 1]} : vector<2x128xf32> to vector<2x32xf32>
    %68 = vector.extract_strided_slice %65 {offsets = [0, 64], sizes = [2, 32], strides = [1, 1]} : vector<2x128xf32> to vector<2x32xf32>
    %69 = vector.extract_strided_slice %64 {offsets = [0, 96], sizes = [2, 32], strides = [1, 1]} : vector<2x128xf32> to vector<2x32xf32>
    %70 = arith.mulf %67, %50 : vector<2x32xf32>
    %71 = arith.mulf %66, %68 : vector<2x32xf32>
    %72 = arith.addf %70, %71 : vector<2x32xf32>
    %73 = math.tanh %72 : vector<2x32xf32>
    %74 = arith.mulf %69, %73 : vector<2x32xf32>
    %c3_i32 = arith.constant 3 : i32
    %c2_i32_29 = arith.constant 2 : i32
    %75 = arith.muli %c3_i32, %c2_i32_29 : i32
    %76 = tpu.assume_multiple %75, 2 : i32
    %77 = arith.index_cast %76 : i32 to index
    %c0_30 = arith.constant 0 : index
    %78 = vector.load %arg11[%77, %c0_30] : memref<16x128xf32, #tpu.memory_space<vmem>>, vector<2x128xf32>
    %c0_31 = arith.constant 0 : index
    %c0_32 = arith.constant 0 : index
    %79 = vector.load %arg4[%c0_31, %c0_32] : memref<32x128xf32, #tpu.memory_space<vmem>>, vector<32x128xf32>
    %cst_33 = arith.constant dense<0.000000e+00> : vector<2x128xf32>
    %80 = tpu.matmul %74, %79, %cst_33 {dimension_numbers = #tpu.dot_dimension_numbers<[1], [0], [0], [1], [0, 0, 1, 1], [], []>} : vector<2x32xf32>, vector<32x128xf32>, vector<2x128xf32> -> vector<2x128xf32>
    %81 = arith.addf %78, %80 : vector<2x128xf32>
    %82 = arith.negf %81 : vector<2x128xf32>
    %83 = math.exp %82 : vector<2x128xf32>
    %cst_34 = arith.constant 1.000000e+00 : f32
    %84 = vector.broadcast %cst_34 : f32 to vector<2x128xf32>
    %85 = arith.addf %84, %83 : vector<2x128xf32>
    %86 = arith.divf %84, %85 : vector<2x128xf32>
    %87 = math.tanh %81 : vector<2x128xf32>
    %88 = vector.extract_strided_slice %86 {offsets = [0, 0], sizes = [2, 32], strides = [1, 1]} : vector<2x128xf32> to vector<2x32xf32>
    %89 = vector.extract_strided_slice %86 {offsets = [0, 32], sizes = [2, 32], strides = [1, 1]} : vector<2x128xf32> to vector<2x32xf32>
    %90 = vector.extract_strided_slice %87 {offsets = [0, 64], sizes = [2, 32], strides = [1, 1]} : vector<2x128xf32> to vector<2x32xf32>
    %91 = vector.extract_strided_slice %86 {offsets = [0, 96], sizes = [2, 32], strides = [1, 1]} : vector<2x128xf32> to vector<2x32xf32>
    %92 = arith.mulf %89, %72 : vector<2x32xf32>
    %93 = arith.mulf %88, %90 : vector<2x32xf32>
    %94 = arith.addf %92, %93 : vector<2x32xf32>
    %95 = math.tanh %94 : vector<2x32xf32>
    %96 = arith.mulf %91, %95 : vector<2x32xf32>
    %c4_i32 = arith.constant 4 : i32
    %c2_i32_35 = arith.constant 2 : i32
    %97 = arith.muli %c4_i32, %c2_i32_35 : i32
    %98 = tpu.assume_multiple %97, 2 : i32
    %99 = arith.index_cast %98 : i32 to index
    %c0_36 = arith.constant 0 : index
    %100 = vector.load %arg11[%99, %c0_36] : memref<16x128xf32, #tpu.memory_space<vmem>>, vector<2x128xf32>
    %c0_37 = arith.constant 0 : index
    %c0_38 = arith.constant 0 : index
    %101 = vector.load %arg4[%c0_37, %c0_38] : memref<32x128xf32, #tpu.memory_space<vmem>>, vector<32x128xf32>
    %cst_39 = arith.constant dense<0.000000e+00> : vector<2x128xf32>
    %102 = tpu.matmul %96, %101, %cst_39 {dimension_numbers = #tpu.dot_dimension_numbers<[1], [0], [0], [1], [0, 0, 1, 1], [], []>} : vector<2x32xf32>, vector<32x128xf32>, vector<2x128xf32> -> vector<2x128xf32>
    %103 = arith.addf %100, %102 : vector<2x128xf32>
    %104 = arith.negf %103 : vector<2x128xf32>
    %105 = math.exp %104 : vector<2x128xf32>
    %cst_40 = arith.constant 1.000000e+00 : f32
    %106 = vector.broadcast %cst_40 : f32 to vector<2x128xf32>
    %107 = arith.addf %106, %105 : vector<2x128xf32>
    %108 = arith.divf %106, %107 : vector<2x128xf32>
    %109 = math.tanh %103 : vector<2x128xf32>
    %110 = vector.extract_strided_slice %108 {offsets = [0, 0], sizes = [2, 32], strides = [1, 1]} : vector<2x128xf32> to vector<2x32xf32>
    %111 = vector.extract_strided_slice %108 {offsets = [0, 32], sizes = [2, 32], strides = [1, 1]} : vector<2x128xf32> to vector<2x32xf32>
    %112 = vector.extract_strided_slice %109 {offsets = [0, 64], sizes = [2, 32], strides = [1, 1]} : vector<2x128xf32> to vector<2x32xf32>
    %113 = vector.extract_strided_slice %108 {offsets = [0, 96], sizes = [2, 32], strides = [1, 1]} : vector<2x128xf32> to vector<2x32xf32>
    %114 = arith.mulf %111, %94 : vector<2x32xf32>
    %115 = arith.mulf %110, %112 : vector<2x32xf32>
    %116 = arith.addf %114, %115 : vector<2x32xf32>
    %117 = math.tanh %116 : vector<2x32xf32>
    %118 = arith.mulf %113, %117 : vector<2x32xf32>
    %c5_i32 = arith.constant 5 : i32
    %c2_i32_41 = arith.constant 2 : i32
    %119 = arith.muli %c5_i32, %c2_i32_41 : i32
    %120 = tpu.assume_multiple %119, 2 : i32
    %121 = arith.index_cast %120 : i32 to index
    %c0_42 = arith.constant 0 : index
    %122 = vector.load %arg11[%121, %c0_42] : memref<16x128xf32, #tpu.memory_space<vmem>>, vector<2x128xf32>
    %c0_43 = arith.constant 0 : index
    %c0_44 = arith.constant 0 : index
    %123 = vector.load %arg4[%c0_43, %c0_44] : memref<32x128xf32, #tpu.memory_space<vmem>>, vector<32x128xf32>
    %cst_45 = arith.constant dense<0.000000e+00> : vector<2x128xf32>
    %124 = tpu.matmul %118, %123, %cst_45 {dimension_numbers = #tpu.dot_dimension_numbers<[1], [0], [0], [1], [0, 0, 1, 1], [], []>} : vector<2x32xf32>, vector<32x128xf32>, vector<2x128xf32> -> vector<2x128xf32>
    %125 = arith.addf %122, %124 : vector<2x128xf32>
    %126 = arith.negf %125 : vector<2x128xf32>
    %127 = math.exp %126 : vector<2x128xf32>
    %cst_46 = arith.constant 1.000000e+00 : f32
    %128 = vector.broadcast %cst_46 : f32 to vector<2x128xf32>
    %129 = arith.addf %128, %127 : vector<2x128xf32>
    %130 = arith.divf %128, %129 : vector<2x128xf32>
    %131 = math.tanh %125 : vector<2x128xf32>
    %132 = vector.extract_strided_slice %130 {offsets = [0, 0], sizes = [2, 32], strides = [1, 1]} : vector<2x128xf32> to vector<2x32xf32>
    %133 = vector.extract_strided_slice %130 {offsets = [0, 32], sizes = [2, 32], strides = [1, 1]} : vector<2x128xf32> to vector<2x32xf32>
    %134 = vector.extract_strided_slice %131 {offsets = [0, 64], sizes = [2, 32], strides = [1, 1]} : vector<2x128xf32> to vector<2x32xf32>
    %135 = vector.extract_strided_slice %130 {offsets = [0, 96], sizes = [2, 32], strides = [1, 1]} : vector<2x128xf32> to vector<2x32xf32>
    %136 = arith.mulf %133, %116 : vector<2x32xf32>
    %137 = arith.mulf %132, %134 : vector<2x32xf32>
    %138 = arith.addf %136, %137 : vector<2x32xf32>
    %139 = math.tanh %138 : vector<2x32xf32>
    %140 = arith.mulf %135, %139 : vector<2x32xf32>
    %c6_i32 = arith.constant 6 : i32
    %c2_i32_47 = arith.constant 2 : i32
    %141 = arith.muli %c6_i32, %c2_i32_47 : i32
    %142 = tpu.assume_multiple %141, 2 : i32
    %143 = arith.index_cast %142 : i32 to index
    %c0_48 = arith.constant 0 : index
    %144 = vector.load %arg11[%143, %c0_48] : memref<16x128xf32, #tpu.memory_space<vmem>>, vector<2x128xf32>
    %c0_49 = arith.constant 0 : index
    %c0_50 = arith.constant 0 : index
    %145 = vector.load %arg4[%c0_49, %c0_50] : memref<32x128xf32, #tpu.memory_space<vmem>>, vector<32x128xf32>
    %cst_51 = arith.constant dense<0.000000e+00> : vector<2x128xf32>
    %146 = tpu.matmul %140, %145, %cst_51 {dimension_numbers = #tpu.dot_dimension_numbers<[1], [0], [0], [1], [0, 0, 1, 1], [], []>} : vector<2x32xf32>, vector<32x128xf32>, vector<2x128xf32> -> vector<2x128xf32>
    %147 = arith.addf %144, %146 : vector<2x128xf32>
    %148 = arith.negf %147 : vector<2x128xf32>
    %149 = math.exp %148 : vector<2x128xf32>
    %cst_52 = arith.constant 1.000000e+00 : f32
    %150 = vector.broadcast %cst_52 : f32 to vector<2x128xf32>
    %151 = arith.addf %150, %149 : vector<2x128xf32>
    %152 = arith.divf %150, %151 : vector<2x128xf32>
    %153 = math.tanh %147 : vector<2x128xf32>
    %154 = vector.extract_strided_slice %152 {offsets = [0, 0], sizes = [2, 32], strides = [1, 1]} : vector<2x128xf32> to vector<2x32xf32>
    %155 = vector.extract_strided_slice %152 {offsets = [0, 32], sizes = [2, 32], strides = [1, 1]} : vector<2x128xf32> to vector<2x32xf32>
    %156 = vector.extract_strided_slice %153 {offsets = [0, 64], sizes = [2, 32], strides = [1, 1]} : vector<2x128xf32> to vector<2x32xf32>
    %157 = vector.extract_strided_slice %152 {offsets = [0, 96], sizes = [2, 32], strides = [1, 1]} : vector<2x128xf32> to vector<2x32xf32>
    %158 = arith.mulf %155, %138 : vector<2x32xf32>
    %159 = arith.mulf %154, %156 : vector<2x32xf32>
    %160 = arith.addf %158, %159 : vector<2x32xf32>
    %161 = math.tanh %160 : vector<2x32xf32>
    %162 = arith.mulf %157, %161 : vector<2x32xf32>
    %c7_i32 = arith.constant 7 : i32
    %c2_i32_53 = arith.constant 2 : i32
    %163 = arith.muli %c7_i32, %c2_i32_53 : i32
    %164 = tpu.assume_multiple %163, 2 : i32
    %165 = arith.index_cast %164 : i32 to index
    %c0_54 = arith.constant 0 : index
    %166 = vector.load %arg11[%165, %c0_54] : memref<16x128xf32, #tpu.memory_space<vmem>>, vector<2x128xf32>
    %c0_55 = arith.constant 0 : index
    %c0_56 = arith.constant 0 : index
    %167 = vector.load %arg4[%c0_55, %c0_56] : memref<32x128xf32, #tpu.memory_space<vmem>>, vector<32x128xf32>
    %cst_57 = arith.constant dense<0.000000e+00> : vector<2x128xf32>
    %168 = tpu.matmul %162, %167, %cst_57 {dimension_numbers = #tpu.dot_dimension_numbers<[1], [0], [0], [1], [0, 0, 1, 1], [], []>} : vector<2x32xf32>, vector<32x128xf32>, vector<2x128xf32> -> vector<2x128xf32>
    %169 = arith.addf %166, %168 : vector<2x128xf32>
    %170 = arith.negf %169 : vector<2x128xf32>
    %171 = math.exp %170 : vector<2x128xf32>
    %cst_58 = arith.constant 1.000000e+00 : f32
    %172 = vector.broadcast %cst_58 : f32 to vector<2x128xf32>
    %173 = arith.addf %172, %171 : vector<2x128xf32>
    %174 = arith.divf %172, %173 : vector<2x128xf32>
    %175 = math.tanh %169 : vector<2x128xf32>
    %176 = vector.extract_strided_slice %174 {offsets = [0, 0], sizes = [2, 32], strides = [1, 1]} : vector<2x128xf32> to vector<2x32xf32>
    %177 = vector.extract_strided_slice %174 {offsets = [0, 32], sizes = [2, 32], strides = [1, 1]} : vector<2x128xf32> to vector<2x32xf32>
    %178 = vector.extract_strided_slice %175 {offsets = [0, 64], sizes = [2, 32], strides = [1, 1]} : vector<2x128xf32> to vector<2x32xf32>
    %179 = vector.extract_strided_slice %174 {offsets = [0, 96], sizes = [2, 32], strides = [1, 1]} : vector<2x128xf32> to vector<2x32xf32>
    %180 = arith.mulf %177, %160 : vector<2x32xf32>
    %181 = arith.mulf %176, %178 : vector<2x32xf32>
    %182 = arith.addf %180, %181 : vector<2x32xf32>
    %183 = math.tanh %182 : vector<2x32xf32>
    %184 = arith.mulf %179, %183 : vector<2x32xf32>
    %c8_i32 = arith.constant 8 : i32
    %c0_59 = arith.constant 0 : index
    %c0_60 = arith.constant 0 : index
    %185 = vector.load %arg6[%c0_59, %c0_60] : memref<32x16xf32, #tpu.memory_space<vmem>>, vector<32x16xf32>
    %cst_61 = arith.constant dense<0.000000e+00> : vector<2x16xf32>
    %186 = tpu.matmul %184, %185, %cst_61 {dimension_numbers = #tpu.dot_dimension_numbers<[1], [0], [0], [1], [0, 0, 1, 1], [], []>} : vector<2x32xf32>, vector<32x16xf32>, vector<2x16xf32> -> vector<2x16xf32>
    %c0_62 = arith.constant 0 : index
    %c0_63 = arith.constant 0 : index
    %187 = vector.load %arg7[%c0_62, %c0_63] : memref<1x16xf32, #tpu.memory_space<vmem>>, vector<1x16xf32>
    %188 = vector.broadcast %187 : vector<1x16xf32> to vector<2x16xf32>
    %189 = arith.addf %186, %188 : vector<2x16xf32>
    %190 = math.tanh %189 : vector<2x16xf32>
    %c0_64 = arith.constant 0 : index
    %c0_65 = arith.constant 0 : index
    %191 = vector.load %arg8[%c0_64, %c0_65] : memref<16x128xf32, #tpu.memory_space<vmem>>, vector<16x128xf32>
    %cst_66 = arith.constant dense<0.000000e+00> : vector<2x128xf32>
    %192 = tpu.matmul %190, %191, %cst_66 {dimension_numbers = #tpu.dot_dimension_numbers<[1], [0], [0], [1], [0, 0, 1, 1], [], []>} : vector<2x16xf32>, vector<16x128xf32>, vector<2x128xf32> -> vector<2x128xf32>
    %c0_67 = arith.constant 0 : index
    %c0_68 = arith.constant 0 : index
    %193 = vector.load %arg9[%c0_67, %c0_68] : memref<1x128xf32, #tpu.memory_space<vmem>>, vector<1x128xf32>
    %194 = vector.broadcast %193 : vector<1x128xf32> to vector<2x128xf32>
    %195 = arith.addf %192, %194 : vector<2x128xf32>
    %c0_69 = arith.constant 0 : index
    %c0_70 = arith.constant 0 : index
    %196 = vector.load %arg10[%c0_69, %c0_70] : memref<2x128xf32, #tpu.memory_space<vmem>>, vector<2x128xf32>
    tpu.vector_store %arg10[%c0_69, %c0_70], %195 {strides = array<i32>} : memref<2x128xf32, #tpu.memory_space<vmem>>, vector<2x128xf32>,
    return
  }
}

</mosaic_0001>

<llo_original>
// kernel: tpu_custom_call.1
$region0: #{tpu_custom_call.1}
  #allocation0 [shape = 'u32[]', space=smem, size = 0x4, offset = 0x4, fixed_abs, tag = 'smem constant byte address 0x4 - core index']
  #allocation1 [shape = 'u32[144,128]{1,0:T(1,128)}', space=vmem, size = 0x12000, scoped, tag = 'internal scratch']
  #allocation2 [shape = 'f32[16,128]{1,0:T(8,128)}', space=vmem, size = 0x2000, scoped, tag = 'scratch operand']
  %s0 = inlined_call_operand.vmem [shape: f32[16,4], index: 0, kind: input, shape index: {}]
  %s1 = inlined_call_operand.vmem [shape: f32[2,32], index: 1, kind: input, shape index: {}]
  %s2 = inlined_call_operand.vmem [shape: f32[2,32], index: 2, kind: input, shape index: {}]
  %s3 = inlined_call_operand.vmem [shape: f32[4,128], index: 3, kind: input, shape index: {}]
  %s4 = inlined_call_operand.vmem [shape: f32[32,128], index: 4, kind: input, shape index: {}]
  %s5 = inlined_call_operand.vmem [shape: f32[1,128], index: 5, kind: input, shape index: {}]
  %s6 = inlined_call_operand.vmem [shape: f32[32,16], index: 6, kind: input, shape index: {}]
  %s7 = inlined_call_operand.vmem [shape: f32[1,16], index: 7, kind: input, shape index: {}]
  %s8 = inlined_call_operand.vmem [shape: f32[16,128], index: 8, kind: input, shape index: {}]
  %s9 = inlined_call_operand.vmem [shape: f32[1,128], index: 9, kind: input, shape index: {}]
  %s10 = inlined_call_operand.hbm [shape: f32[2,128], index: 10, kind: output, shape index: {}]
  %s11 = sld [smem:[#allocation0]]
  $region50: #{tpu_custom_call.1} parent=0
    _
  %s13 = ssub.s32 1, %s11
  %s14 = scalar_select 0, %s13, %s11
  $region1: #{tpu_custom_call.1} parent=0
    #allocation3 [shape = 'u8[1024]{0}', space=vmem, size = 0x400, scoped, tag = 'output window, operand 0, single buffered']
    #allocation4 [shape = 's32[1]{0}', space=sflag, size = 0x4, scoped, tag = 'scoped memory for tpu_custom_call.1']
    %15 = vsyncpa [#allocation4], 0
    // Predicated region
    $region2: #{tpu_custom_call.1} parent=1 // pred_check
      _
    $region3: #{tpu_custom_call.1} parent=1 // pred_check_branch
      %17 = sbr.rel (0) target = $region5
    $region4: #{tpu_custom_call.1} parent=1 // pred_region
      _
    $region5: #{tpu_custom_call.1} parent=1 // pred_fallthru
      _
    // Predicated region
    $region6: #{tpu_custom_call.1} parent=1 // pred_check
      _
    $region7: #{tpu_custom_call.1} parent=1 // pred_check_branch
      %19 = sbr.rel (0) target = $region9
    $region8: #{tpu_custom_call.1} parent=1 // pred_region
      _
    $region9: #{tpu_custom_call.1} parent=1 // pred_fallthru
      _
    // Predicated region
    $region10: #{tpu_custom_call.1} parent=1 // pred_check
      _
    $region11: #{tpu_custom_call.1} parent=1 // pred_check_branch
      %21 = sbr.rel (0) target = $region13
    $region12: #{tpu_custom_call.1} parent=1 // pred_region
      _
    $region13: #{tpu_custom_call.1} parent=1 // pred_fallthru
      _
    // Predicated region
    $region14: #{tpu_custom_call.1} parent=1 // pred_check
      _
    $region15: #{tpu_custom_call.1} parent=1 // pred_check_branch
      %23 = sbr.rel (0) target = $region17
    $region16: #{tpu_custom_call.1} parent=1 // pred_region
      _
    $region17: #{tpu_custom_call.1} parent=1 // pred_fallthru
      _
    // Predicated region
    $region18: #{tpu_custom_call.1} parent=1 // pred_check
      _
    $region19: #{tpu_custom_call.1} parent=1 // pred_check_branch
      %25 = sbr.rel (0) target = $region21
    $region20: #{tpu_custom_call.1} parent=1 // pred_region
      _
    $region21: #{tpu_custom_call.1} parent=1 // pred_fallthru
      _
    // Predicated region
    $region22: #{tpu_custom_call.1} parent=1 // pred_check
      _
    $region23: #{tpu_custom_call.1} parent=1 // pred_check_branch
      %27 = sbr.rel (0) target = $region25
    $region24: #{tpu_custom_call.1} parent=1 // pred_region
      _
    $region25: #{tpu_custom_call.1} parent=1 // pred_fallthru
      _
    // Predicated region
    $region26: #{tpu_custom_call.1} parent=1 // pred_check
      _
    $region27: #{tpu_custom_call.1} parent=1 // pred_check_branch
      %29 = sbr.rel (0) target = $region29
    $region28: #{tpu_custom_call.1} parent=1 // pred_region
      _
    $region29: #{tpu_custom_call.1} parent=1 // pred_fallthru
      _
    // Predicated region
    $region30: #{tpu_custom_call.1} parent=1 // pred_check
      _
    $region31: #{tpu_custom_call.1} parent=1 // pred_check_branch
      %31 = sbr.rel (0) target = $region33
    $region32: #{tpu_custom_call.1} parent=1 // pred_region
      _
    $region33: #{tpu_custom_call.1} parent=1 // pred_fallthru
      _
    // Predicated region
    $region34: #{tpu_custom_call.1} parent=1 // pred_check
      _
    $region35: #{tpu_custom_call.1} parent=1 // pred_check_branch
      %33 = sbr.rel (0) target = $region37
    $region36: #{tpu_custom_call.1} parent=1 // pred_region
      _
    $region37: #{tpu_custom_call.1} parent=1 // pred_fallthru
      _
    // Predicated region
    $region38: #{tpu_custom_call.1} parent=1 // pred_check
      _
    $region39: #{tpu_custom_call.1} parent=1 // pred_check_branch
      %35 = sbr.rel (0) target = $region41
    $region40: #{tpu_custom_call.1} parent=1 // pred_region
      _
    $region41: #{tpu_custom_call.1} parent=1 // pred_fallthru
      _
    %v36 = vld [vmem:[%s0] sm:$0xff]
    %v37 = vld [vmem:[%s0 + $0x8] sm:$0xff]
    %v38 = vld [vmem:[%s3] sm:$0xf]
    %v39 = vld [vmem:[%s5] sm:$0x1]
    %v41 = vlaneseq
    %v42 = vshrl.u32 %v41, 7
    %v43 = vsub.s32 0, %v42
    %v44 = vrot.slane %v39, %v43
    %vm46 = vcmask 31744
    %v48 = vsel %vm46, %v36, 0
    %v51 = vsel %vm46, %v37, 0
    %vm53 = vcmask 1043456
    %v55 = vsel %vm53, %v38, 0
    %57 = vmatprep.subr.mxu0 0.0
    %58 = vmatpush1.msra.mxu0 %v55
    %59 = vmatprep.subr.mxu0 0.0
    %60 = vmatpush1.msra.mxu0 0.0
    %61 = vmatprep.subr.mxu0 0.0
    %62 = vmatpush1.msra.mxu0 0.0
    %63 = vmatprep.subr.mxu0 0.0
    %64 = vmatpush1.msra.mxu0 0.0
    %65 = vmatprep.subr.mxu0 0.0
    %66 = vmatpush1.msra.mxu0 0.0
    %67 = vmatprep.subr.mxu0 0.0
    %68 = vmatpush1.msra.mxu0 0.0
    %69 = vmatprep.subr.mxu0 0.0
    %70 = vmatpush1.msra.mxu0 0.0
    %71 = vmatprep.subr.mxu0 0.0
    %72 = vmatpush1.msra.mxu0 0.0
    %73 = vmatprep.subr.mxu0 0.0
    %74 = vmatpush1.msra.mxu0 0.0
    %75 = vmatprep.subr.mxu0 0.0
    %76 = vmatpush1.msra.mxu0 0.0
    %77 = vmatprep.subr.mxu0 0.0
    %78 = vmatpush1.msra.mxu0 0.0
    %79 = vmatprep.subr.mxu0 0.0
    %80 = vmatpush1.msra.mxu0 0.0
    %81 = vmatprep.subr.mxu0 0.0
    %82 = vmatpush1.msra.mxu0 0.0
    %83 = vmatprep.subr.mxu0 0.0
    %84 = vmatpush1.msra.mxu0 0.0
    %85 = vmatprep.subr.mxu0 0.0
    %86 = vmatpush1.msra.mxu0 0.0
    %87 = vmatprep.subr.mxu0 0.0
    %88 = vmatpush1.msra.mxu0 0.0
    %89 = vmatprep.subr.mxu0 0.0
    %90 = vmatpush1.msra.mxu0 0.0
    %91 = vmatprep.subr.mxu0 0.0
    %92 = vmatpush1.msra.mxu0 0.0
    %93 = vmatprep.subr.mxu0 0.0
    %94 = vmatpush1.msra.mxu0 0.0
    %95 = vmatprep.subr.mxu0 0.0
    %96 = vmatpush1.msra.mxu0 0.0
    %97 = vmatprep.subr.mxu0 0.0
    %98 = vmatpush1.msra.mxu0 0.0
    %99 = vmatprep.subr.mxu0 0.0
    %100 = vmatpush1.msra.mxu0 0.0
    %101 = vmatprep.subr.mxu0 0.0
    %102 = vmatpush1.msra.mxu0 0.0
    %103 = vmatprep.subr.mxu0 0.0
    %104 = vmatpush1.msra.mxu0 0.0
    %105 = vmatprep.subr.mxu0 0.0
    %106 = vmatpush1.msra.mxu0 0.0
    %107 = vmatprep.subr.mxu0 0.0
    %108 = vmatpush1.msra.mxu0 0.0
    %109 = vmatprep.subr.mxu0 0.0
    %110 = vmatpush1.msra.mxu0 0.0
    %111 = vmatprep.subr.mxu0 0.0
    %112 = vmatpush1.msra.mxu0 0.0
    %113 = vmatprep.subr.mxu0 0.0
    %114 = vmatpush1.msra.mxu0 0.0
    %115 = vmatprep.subr.mxu0 0.0
    %116 = vmatpush1.msra.mxu0 0.0
    %117 = vmatprep.subr.mxu0 0.0
    %118 = vmatpush1.msra.mxu0 0.0
    %119 = vmatprep.subr.mxu0 0.0
    %120 = vmatpush1.msra.mxu0 0.0
    %121 = vmatprep.mubr.f32.mxu0 0.0
    %122 = vmatmul.mubr.f32.gmra.mrb[0].mxu0 %v48
    %v123 = vpop.f32.mrb[0].mxu0
    %v124 = vadd.f32 %v44, %v123
    %v125 = vpop.f32.mrb[0].mxu0
    %126 = vmatprep.mubr.f32.mxu0 0.0
    %127 = vmatmul.mubr.f32.gmra.mrb[0].mxu0 %v51
    %v128 = vpop.f32.mrb[0].mxu0
    %v129 = vadd.f32 %v44, %v128
    %v130 = vpop.f32.mrb[0].mxu0
    %131 = vdwg.mxu0
    %132 = vst [vmem:[#allocation2] sm:$0xff] %v124
    %133 = vst [vmem:[#allocation2 + $0x8] sm:$0xff] %v129
    %v134 = vld [vmem:[%s1] sm:$0x3]
    %v135 = vld [vmem:[%s2] sm:$0x3]
    %v136 = vld [vmem:[#allocation2] sm:$0x3]
    %v137 = vld [vmem:[%s4] sm:$0xff]
    %v138 = vld [vmem:[%s4 + $0x8] sm:$0xff]
    %v139 = vld [vmem:[%s4 + $0x10] sm:$0xff]
    %v140 = vld [vmem:[%s4 + $0x18] sm:$0xff]
    %vm141 = vcmask 261120
    %v143 = vsel %vm141, %v134, 0
    %145 = vmatprep.subr.mxu0 0.0
    %146 = vmatpush1.msra.mxu0 %v137
    %147 = vmatprep.subr.mxu0 0.0
    %148 = vmatpush1.msra.mxu0 %v138
    %149 = vmatprep.subr.mxu0 0.0
    %150 = vmatpush1.msra.mxu0 %v139
    %151 = vmatprep.subr.mxu0 0.0
    %152 = vmatpush1.msra.mxu0 %v140
    %153 = vmatprep.subr.mxu0 0.0
    %154 = vmatpush1.msra.mxu0 0.0
    %155 = vmatprep.subr.mxu0 0.0
    %156 = vmatpush1.msra.mxu0 0.0
    %157 = vmatprep.subr.mxu0 0.0
    %158 = vmatpush1.msra.mxu0 0.0
    %159 = vmatprep.subr.mxu0 0.0
    %160 = vmatpush1.msra.mxu0 0.0
    %161 = vmatprep.subr.mxu0 0.0
    %162 = vmatpush1.msra.mxu0 0.0
    %163 = vmatprep.subr.mxu0 0.0
    %164 = vmatpush1.msra.mxu0 0.0
    %165 = vmatprep.subr.mxu0 0.0
    %166 = vmatpush1.msra.mxu0 0.0
    %167 = vmatprep.subr.mxu0 0.0
    %168 = vmatpush1.msra.mxu0 0.0
    %169 = vmatprep.subr.mxu0 0.0
    %170 = vmatpush1.msra.mxu0 0.0
    %171 = vmatprep.subr.mxu0 0.0
    %172 = vmatpush1.msra.mxu0 0.0
    %173 = vmatprep.subr.mxu0 0.0
    %174 = vmatpush1.msra.mxu0 0.0
    %175 = vmatprep.subr.mxu0 0.0
    %176 = vmatpush1.msra.mxu0 0.0
    %177 = vmatprep.subr.mxu0 0.0
    %178 = vmatpush1.msra.mxu0 0.0
    %179 = vmatprep.subr.mxu0 0.0
    %180 = vmatpush1.msra.mxu0 0.0
    %181 = vmatprep.subr.mxu0 0.0
    %182 = vmatpush1.msra.mxu0 0.0
    %183 = vmatprep.subr.mxu0 0.0
    %184 = vmatpush1.msra.mxu0 0.0
    %185 = vmatprep.subr.mxu0 0.0
    %186 = vmatpush1.msra.mxu0 0.0
    %187 = vmatprep.subr.mxu0 0.0
    %188 = vmatpush1.msra.mxu0 0.0
    %189 = vmatprep.subr.mxu0 0.0
    %190 = vmatpush1.msra.mxu0 0.0
    %191 = vmatprep.subr.mxu0 0.0
    %192 = vmatpush1.msra.mxu0 0.0
    %193 = vmatprep.subr.mxu0 0.0
    %194 = vmatpush1.msra.mxu0 0.0
    %195 = vmatprep.subr.mxu0 0.0
    %196 = vmatpush1.msra.mxu0 0.0
    %197 = vmatprep.subr.mxu0 0.0
    %198 = vmatpush1.msra.mxu0 0.0
    %199 = vmatprep.subr.mxu0 0.0
    %200 = vmatpush1.msra.mxu0 0.0
    %201 = vmatprep.subr.mxu0 0.0
    %202 = vmatpush1.msra.mxu0 0.0
    %203 = vmatprep.subr.mxu0 0.0
    %204 = vmatpush1.msra.mxu0 0.0
    %205 = vmatprep.subr.mxu0 0.0
    %206 = vmatpush1.msra.mxu0 0.0
    %207 = vmatprep.subr.mxu0 0.0
    %208 = vmatpush1.msra.mxu0 0.0
    %209 = vmatprep.mubr.f32.mxu0 0.0
    %210 = vmatmul.mubr.f32.gmra.mrb[0].mxu0 %v143
    %v211 = vpop.f32.mrb[0].mxu0
    %v212 = vadd.f32 0.0, %v211
    %v213 = vpop.f32.mrb[0].mxu0
    %214 = vdwg.mxu0
    %v215 = vadd.f32 %v136, %v212
    %v216 = vxor.u32 %v215, 2147483648
    %v217 = vmul.f32 %v216, 1.442695
    %v218 = vpow.pop %v217
    %v219 = vadd.f32 %v218, 1.0
    %v220 = vrcp.pop %v219
    %v221 = vmul.f32 1.0, %v220
    %v222 = vtanh.pop %v215
    %224 = vrot.lane.b32.xlu0 %v135, 32
    %v225 = vpop.permute.xlu0 %224
    %v227 = vmul.f32 %v221, %v225
    %229 = vrot.lane.b32.xlu0 %v222, 64
    %v230 = vpop.permute.xlu0 %229
    %v232 = vmul.f32 %v221, %v230
    %234 = vrot.lane.b32.xlu0 %v232, 32
    %v235 = vpop.permute.xlu0 %234
    %v237 = vadd.f32 %v227, %v235
    %v238 = vtanh.pop %v237
    %240 = vrot.lane.b32.xlu0 %v238, 64
    %v241 = vpop.permute.xlu0 %240
    %v243 = vmul.f32 %v221, %v241
    %s244 = scalar_lea.vmem [#allocation2], 2
    %v245 = vld [vmem:[%s244] sm:$0x3]
    %247 = vrot.lane.b32.xlu0 %v243, 32
    %v248 = vpop.permute.xlu0 %247
    %v249 = vsel %vm141, %v248, 0
    %251 = vmatprep.subr.mxu0 0.0
    %252 = vmatpush1.msra.mxu0 %v137
    %253 = vmatprep.subr.mxu0 0.0
    %254 = vmatpush1.msra.mxu0 %v138
    %255 = vmatprep.subr.mxu0 0.0
    %256 = vmatpush1.msra.mxu0 %v139
    %257 = vmatprep.subr.mxu0 0.0
    %258 = vmatpush1.msra.mxu0 %v140
    %259 = vmatprep.subr.mxu0 0.0
    %260 = vmatpush1.msra.mxu0 0.0
    %261 = vmatprep.subr.mxu0 0.0
    %262 = vmatpush1.msra.mxu0 0.0
    %263 = vmatprep.subr.mxu0 0.0
    %264 = vmatpush1.msra.mxu0 0.0
    %265 = vmatprep.subr.mxu0 0.0
    %266 = vmatpush1.msra.mxu0 0.0
    %267 = vmatprep.subr.mxu0 0.0
    %268 = vmatpush1.msra.mxu0 0.0
    %269 = vmatprep.subr.mxu0 0.0
    %270 = vmatpush1.msra.mxu0 0.0
    %271 = vmatprep.subr.mxu0 0.0
    %272 = vmatpush1.msra.mxu0 0.0
    %273 = vmatprep.subr.mxu0 0.0
    %274 = vmatpush1.msra.mxu0 0.0
    %275 = vmatprep.subr.mxu0 0.0
    %276 = vmatpush1.msra.mxu0 0.0
    %277 = vmatprep.subr.mxu0 0.0
    %278 = vmatpush1.msra.mxu0 0.0
    %279 = vmatprep.subr.mxu0 0.0
    %280 = vmatpush1.msra.mxu0 0.0
    %281 = vmatprep.subr.mxu0 0.0
    %282 = vmatpush1.msra.mxu0 0.0
    %283 = vmatprep.subr.mxu0 0.0
    %284 = vmatpush1.msra.mxu0 0.0
    %285 = vmatprep.subr.mxu0 0.0
    %286 = vmatpush1.msra.mxu0 0.0
    %287 = vmatprep.subr.mxu0 0.0
    %288 = vmatpush1.msra.mxu0 0.0
    %289 = vmatprep.subr.mxu0 0.0
    %290 = vmatpush1.msra.mxu0 0.0
    %291 = vmatprep.subr.mxu0 0.0
    %292 = vmatpush1.msra.mxu0 0.0
    %293 = vmatprep.subr.mxu0 0.0
    %294 = vmatpush1.msra.mxu0 0.0
    %295 = vmatprep.subr.mxu0 0.0
    %296 = vmatpush1.msra.mxu0 0.0
    %297 = vmatprep.subr.mxu0 0.0
    %298 = vmatpush1.msra.mxu0 0.0
    %299 = vmatprep.subr.mxu0 0.0
    %300 = vmatpush1.msra.mxu0 0.0
    %301 = vmatprep.subr.mxu0 0.0
    %302 = vmatpush1.msra.mxu0 0.0
    %303 = vmatprep.subr.mxu0 0.0
    %304 = vmatpush1.msra.mxu0 0.0
    %305 = vmatprep.subr.mxu0 0.0
    %306 = vmatpush1.msra.mxu0 0.0
    %307 = vmatprep.subr.mxu0 0.0
    %308 = vmatpush1.msra.mxu0 0.0
    %309 = vmatprep.subr.mxu0 0.0
    %310 = vmatpush1.msra.mxu0 0.0
    %311 = vmatprep.subr.mxu0 0.0
    %312 = vmatpush1.msra.mxu0 0.0
    %313 = vmatprep.subr.mxu0 0.0
    %314 = vmatpush1.msra.mxu0 0.0
    %315 = vmatprep.mubr.f32.mxu0 0.0
    %316 = vmatmul.mubr.f32.gmra.mrb[0].mxu0 %v249
    %v317 = vpop.f32.mrb[0].mxu0
    %v318 = vadd.f32 0.0, %v317
    %v319 = vpop.f32.mrb[0].mxu0
    %320 = vdwg.mxu0
    %v321 = vadd.f32 %v245, %v318
    %v322 = vxor.u32 %v321, 2147483648
    %v323 = vmul.f32 %v322, 1.442695
    %v324 = vpow.pop %v323
    %v325 = vadd.f32 %v324, 1.0
    %v326 = vrcp.pop %v325
    %v327 = vmul.f32 1.0, %v326
    %v328 = vtanh.pop %v321
    %v329 = vmul.f32 %v327, %v237
    %331 = vrot.lane.b32.xlu0 %v328, 64
    %v332 = vpop.permute.xlu0 %331
    %v334 = vmul.f32 %v327, %v332
    %336 = vrot.lane.b32.xlu0 %v334, 32
    %v337 = vpop.permute.xlu0 %336
    %v339 = vadd.f32 %v329, %v337
    %v340 = vtanh.pop %v339
    %342 = vrot.lane.b32.xlu0 %v340, 64
    %v343 = vpop.permute.xlu0 %342
    %v345 = vmul.f32 %v327, %v343
    %s346 = scalar_lea.vmem [#allocation2], 4
    %v347 = vld [vmem:[%s346] sm:$0x3]
    %349 = vrot.lane.b32.xlu0 %v345, 32
    %v350 = vpop.permute.xlu0 %349
    %v351 = vsel %vm141, %v350, 0
    %353 = vmatprep.subr.mxu0 0.0
    %354 = vmatpush1.msra.mxu0 %v137
    %355 = vmatprep.subr.mxu0 0.0
    %356 = vmatpush1.msra.mxu0 %v138
    %357 = vmatprep.subr.mxu0 0.0
    %358 = vmatpush1.msra.mxu0 %v139
    %359 = vmatprep.subr.mxu0 0.0
    %360 = vmatpush1.msra.mxu0 %v140
    %361 = vmatprep.subr.mxu0 0.0
    %362 = vmatpush1.msra.mxu0 0.0
    %363 = vmatprep.subr.mxu0 0.0
    %364 = vmatpush1.msra.mxu0 0.0
    %365 = vmatprep.subr.mxu0 0.0
    %366 = vmatpush1.msra.mxu0 0.0
    %367 = vmatprep.subr.mxu0 0.0
    %368 = vmatpush1.msra.mxu0 0.0
    %369 = vmatprep.subr.mxu0 0.0
    %370 = vmatpush1.msra.mxu0 0.0
    %371 = vmatprep.subr.mxu0 0.0
    %372 = vmatpush1.msra.mxu0 0.0
    %373 = vmatprep.subr.mxu0 0.0
    %374 = vmatpush1.msra.mxu0 0.0
    %375 = vmatprep.subr.mxu0 0.0
    %376 = vmatpush1.msra.mxu0 0.0
    %377 = vmatprep.subr.mxu0 0.0
    %378 = vmatpush1.msra.mxu0 0.0
    %379 = vmatprep.subr.mxu0 0.0
    %380 = vmatpush1.msra.mxu0 0.0
    %381 = vmatprep.subr.mxu0 0.0
    %382 = vmatpush1.msra.mxu0 0.0
    %383 = vmatprep.subr.mxu0 0.0
    %384 = vmatpush1.msra.mxu0 0.0
    %385 = vmatprep.subr.mxu0 0.0
    %386 = vmatpush1.msra.mxu0 0.0
    %387 = vmatprep.subr.mxu0 0.0
    %388 = vmatpush1.msra.mxu0 0.0
    %389 = vmatprep.subr.mxu0 0.0
    %390 = vmatpush1.msra.mxu0 0.0
    %391 = vmatprep.subr.mxu0 0.0
    %392 = vmatpush1.msra.mxu0 0.0
    %393 = vmatprep.subr.mxu0 0.0
    %394 = vmatpush1.msra.mxu0 0.0
    %395 = vmatprep.subr.mxu0 0.0
    %396 = vmatpush1.msra.mxu0 0.0
    %397 = vmatprep.subr.mxu0 0.0
    %398 = vmatpush1.msra.mxu0 0.0
    %399 = vmatprep.subr.mxu0 0.0
    %400 = vmatpush1.msra.mxu0 0.0
    %401 = vmatprep.subr.mxu0 0.0
    %402 = vmatpush1.msra.mxu0 0.0
    %403 = vmatprep.subr.mxu0 0.0
    %404 = vmatpush1.msra.mxu0 0.0
    %405 = vmatprep.subr.mxu0 0.0
    %406 = vmatpush1.msra.mxu0 0.0
    %407 = vmatprep.subr.mxu0 0.0
    %408 = vmatpush1.msra.mxu0 0.0
    %409 = vmatprep.subr.mxu0 0.0
    %410 = vmatpush1.msra.mxu0 0.0
    %411 = vmatprep.subr.mxu0 0.0
    %412 = vmatpush1.msra.mxu0 0.0
    %413 = vmatprep.subr.mxu0 0.0
    %414 = vmatpush1.msra.mxu0 0.0
    %415 = vmatprep.subr.mxu0 0.0
    %416 = vmatpush1.msra.mxu0 0.0
    %417 = vmatprep.mubr.f32.mxu0 0.0
    %418 = vmatmul.mubr.f32.gmra.mrb[0].mxu0 %v351
    %v419 = vpop.f32.mrb[0].mxu0
    %v420 = vadd.f32 0.0, %v419
    %v421 = vpop.f32.mrb[0].mxu0
    %422 = vdwg.mxu0
    %v423 = vadd.f32 %v347, %v420
    %v424 = vxor.u32 %v423, 2147483648
    %v425 = vmul.f32 %v424, 1.442695
    %v426 = vpow.pop %v425
    %v427 = vadd.f32 %v426, 1.0
    %v428 = vrcp.pop %v427
    %v429 = vmul.f32 1.0, %v428
    %v430 = vtanh.pop %v423
    %v431 = vmul.f32 %v429, %v339
    %433 = vrot.lane.b32.xlu0 %v430, 64
    %v434 = vpop.permute.xlu0 %433
    %v436 = vmul.f32 %v429, %v434
    %438 = vrot.lane.b32.xlu0 %v436, 32
    %v439 = vpop.permute.xlu0 %438
    %v441 = vadd.f32 %v431, %v439
    %v442 = vtanh.pop %v441
    %444 = vrot.lane.b32.xlu0 %v442, 64
    %v445 = vpop.permute.xlu0 %444
    %v447 = vmul.f32 %v429, %v445
    %s448 = scalar_lea.vmem [#allocation2], 6
    %v449 = vld [vmem:[%s448] sm:$0x3]
    %451 = vrot.lane.b32.xlu0 %v447, 32
    %v452 = vpop.permute.xlu0 %451
    %v453 = vsel %vm141, %v452, 0
    %455 = vmatprep.subr.mxu0 0.0
    %456 = vmatpush1.msra.mxu0 %v137
    %457 = vmatprep.subr.mxu0 0.0
    %458 = vmatpush1.msra.mxu0 %v138
    %459 = vmatprep.subr.mxu0 0.0
    %460 = vmatpush1.msra.mxu0 %v139
    %461 = vmatprep.subr.mxu0 0.0
    %462 = vmatpush1.msra.mxu0 %v140
    %463 = vmatprep.subr.mxu0 0.0
    %464 = vmatpush1.msra.mxu0 0.0
    %465 = vmatprep.subr.mxu0 0.0
    %466 = vmatpush1.msra.mxu0 0.0
    %467 = vmatprep.subr.mxu0 0.0
    %468 = vmatpush1.msra.mxu0 0.0
    %469 = vmatprep.subr.mxu0 0.0
    %470 = vmatpush1.msra.mxu0 0.0
    %471 = vmatprep.subr.mxu0 0.0
    %472 = vmatpush1.msra.mxu0 0.0
    %473 = vmatprep.subr.mxu0 0.0
    %474 = vmatpush1.msra.mxu0 0.0
    %475 = vmatprep.subr.mxu0 0.0
    %476 = vmatpush1.msra.mxu0 0.0
    %477 = vmatprep.subr.mxu0 0.0
    %478 = vmatpush1.msra.mxu0 0.0
    %479 = vmatprep.subr.mxu0 0.0
    %480 = vmatpush1.msra.mxu0 0.0
    %481 = vmatprep.subr.mxu0 0.0
    %482 = vmatpush1.msra.mxu0 0.0
    %483 = vmatprep.subr.mxu0 0.0
    %484 = vmatpush1.msra.mxu0 0.0
    %485 = vmatprep.subr.mxu0 0.0
    %486 = vmatpush1.msra.mxu0 0.0
    %487 = vmatprep.subr.mxu0 0.0
    %488 = vmatpush1.msra.mxu0 0.0
    %489 = vmatprep.subr.mxu0 0.0
    %490 = vmatpush1.msra.mxu0 0.0
    %491 = vmatprep.subr.mxu0 0.0
    %492 = vmatpush1.msra.mxu0 0.0
    %493 = vmatprep.subr.mxu0 0.0
    %494 = vmatpush1.msra.mxu0 0.0
    %495 = vmatprep.subr.mxu0 0.0
    %496 = vmatpush1.msra.mxu0 0.0
    %497 = vmatprep.subr.mxu0 0.0
    %498 = vmatpush1.msra.mxu0 0.0
    %499 = vmatprep.subr.mxu0 0.0
    %500 = vmatpush1.msra.mxu0 0.0
    %501 = vmatprep.subr.mxu0 0.0
    %502 = vmatpush1.msra.mxu0 0.0
    %503 = vmatprep.subr.mxu0 0.0
    %504 = vmatpush1.msra.mxu0 0.0
    %505 = vmatprep.subr.mxu0 0.0
    %506 = vmatpush1.msra.mxu0 0.0
    %507 = vmatprep.subr.mxu0 0.0
    %508 = vmatpush1.msra.mxu0 0.0
    %509 = vmatprep.subr.mxu0 0.0
    %510 = vmatpush1.msra.mxu0 0.0
    %511 = vmatprep.subr.mxu0 0.0
    %512 = vmatpush1.msra.mxu0 0.0
    %513 = vmatprep.subr.mxu0 0.0
    %514 = vmatpush1.msra.mxu0 0.0
    %515 = vmatprep.subr.mxu0 0.0
    %516 = vmatpush1.msra.mxu0 0.0
    %517 = vmatprep.subr.mxu0 0.0
    %518 = vmatpush1.msra.mxu0 0.0
    %519 = vmatprep.mubr.f32.mxu0 0.0
    %520 = vmatmul.mubr.f32.gmra.mrb[0].mxu0 %v453
    %v521 = vpop.f32.mrb[0].mxu0
    %v522 = vadd.f32 0.0, %v521
    %v523 = vpop.f32.mrb[0].mxu0
    %524 = vdwg.mxu0
    %v525 = vadd.f32 %v449, %v522
    %v526 = vxor.u32 %v525, 2147483648
    %v527 = vmul.f32 %v526, 1.442695
    %v528 = vpow.pop %v527
    %v529 = vadd.f32 %v528, 1.0
    %v530 = vrcp.pop %v529
    %v531 = vmul.f32 1.0, %v530
    %v532 = vtanh.pop %v525
    %v533 = vmul.f32 %v531, %v441
    %535 = vrot.lane.b32.xlu0 %v532, 64
    %v536 = vpop.permute.xlu0 %535
    %v538 = vmul.f32 %v531, %v536
    %540 = vrot.lane.b32.xlu0 %v538, 32
    %v541 = vpop.permute.xlu0 %540
    %v543 = vadd.f32 %v533, %v541
    %v544 = vtanh.pop %v543
    %546 = vrot.lane.b32.xlu0 %v544, 64
    %v547 = vpop.permute.xlu0 %546
    %v549 = vmul.f32 %v531, %v547
    %s550 = scalar_lea.vmem [#allocation2], 8
    %v551 = vld [vmem:[%s550] sm:$0x3]
    %553 = vrot.lane.b32.xlu0 %v549, 32
    %v554 = vpop.permute.xlu0 %553
    %v555 = vsel %vm141, %v554, 0
    %557 = vmatprep.subr.mxu0 0.0
    %558 = vmatpush1.msra.mxu0 %v137
    %559 = vmatprep.subr.mxu0 0.0
    %560 = vmatpush1.msra.mxu0 %v138
    %561 = vmatprep.subr.mxu0 0.0
    %562 = vmatpush1.msra.mxu0 %v139
    %563 = vmatprep.subr.mxu0 0.0
    %564 = vmatpush1.msra.mxu0 %v140
    %565 = vmatprep.subr.mxu0 0.0
    %566 = vmatpush1.msra.mxu0 0.0
    %567 = vmatprep.subr.mxu0 0.0
    %568 = vmatpush1.msra.mxu0 0.0
    %569 = vmatprep.subr.mxu0 0.0
    %570 = vmatpush1.msra.mxu0 0.0
    %571 = vmatprep.subr.mxu0 0.0
    %572 = vmatpush1.msra.mxu0 0.0
    %573 = vmatprep.subr.mxu0 0.0
    %574 = vmatpush1.msra.mxu0 0.0
    %575 = vmatprep.subr.mxu0 0.0
    %576 = vmatpush1.msra.mxu0 0.0
    %577 = vmatprep.subr.mxu0 0.0
    %578 = vmatpush1.msra.mxu0 0.0
    %579 = vmatprep.subr.mxu0 0.0
    %580 = vmatpush1.msra.mxu0 0.0
    %581 = vmatprep.subr.mxu0 0.0
    %582 = vmatpush1.msra.mxu0 0.0
    %583 = vmatprep.subr.mxu0 0.0
    %584 = vmatpush1.msra.mxu0 0.0
    %585 = vmatprep.subr.mxu0 0.0
    %586 = vmatpush1.msra.mxu0 0.0
    %587 = vmatprep.subr.mxu0 0.0
    %588 = vmatpush1.msra.mxu0 0.0
    %589 = vmatprep.subr.mxu0 0.0
    %590 = vmatpush1.msra.mxu0 0.0
    %591 = vmatprep.subr.mxu0 0.0
    %592 = vmatpush1.msra.mxu0 0.0
    %593 = vmatprep.subr.mxu0 0.0
    %594 = vmatpush1.msra.mxu0 0.0
    %595 = vmatprep.subr.mxu0 0.0
    %596 = vmatpush1.msra.mxu0 0.0
    %597 = vmatprep.subr.mxu0 0.0
    %598 = vmatpush1.msra.mxu0 0.0
    %599 = vmatprep.subr.mxu0 0.0
    %600 = vmatpush1.msra.mxu0 0.0
    %601 = vmatprep.subr.mxu0 0.0
    %602 = vmatpush1.msra.mxu0 0.0
    %603 = vmatprep.subr.mxu0 0.0
    %604 = vmatpush1.msra.mxu0 0.0
    %605 = vmatprep.subr.mxu0 0.0
    %606 = vmatpush1.msra.mxu0 0.0
    %607 = vmatprep.subr.mxu0 0.0
    %608 = vmatpush1.msra.mxu0 0.0
    %609 = vmatprep.subr.mxu0 0.0
    %610 = vmatpush1.msra.mxu0 0.0
    %611 = vmatprep.subr.mxu0 0.0
    %612 = vmatpush1.msra.mxu0 0.0
    %613 = vmatprep.subr.mxu0 0.0
    %614 = vmatpush1.msra.mxu0 0.0
    %615 = vmatprep.subr.mxu0 0.0
    %616 = vmatpush1.msra.mxu0 0.0
    %617 = vmatprep.subr.mxu0 0.0
    %618 = vmatpush1.msra.mxu0 0.0
    %619 = vmatprep.subr.mxu0 0.0
    %620 = vmatpush1.msra.mxu0 0.0
    %621 = vmatprep.mubr.f32.mxu0 0.0
    %622 = vmatmul.mubr.f32.gmra.mrb[0].mxu0 %v555
    %v623 = vpop.f32.mrb[0].mxu0
    %v624 = vadd.f32 0.0, %v623
    %v625 = vpop.f32.mrb[0].mxu0
    %626 = vdwg.mxu0
    %v627 = vadd.f32 %v551, %v624
    %v628 = vxor.u32 %v627, 2147483648
    %v629 = vmul.f32 %v628, 1.442695
    %v630 = vpow.pop %v629
    %v631 = vadd.f32 %v630, 1.0
    %v632 = vrcp.pop %v631
    %v633 = vmul.f32 1.0, %v632
    %v634 = vtanh.pop %v627
    %v635 = vmul.f32 %v633, %v543
    %637 = vrot.lane.b32.xlu0 %v634, 64
    %v638 = vpop.permute.xlu0 %637
    %v640 = vmul.f32 %v633, %v638
    %642 = vrot.lane.b32.xlu0 %v640, 32
    %v643 = vpop.permute.xlu0 %642
    %v645 = vadd.f32 %v635, %v643
    %v646 = vtanh.pop %v645
    %648 = vrot.lane.b32.xlu0 %v646, 64
    %v649 = vpop.permute.xlu0 %648
    %v651 = vmul.f32 %v633, %v649
    %s652 = scalar_lea.vmem [#allocation2], 10
    %v653 = vld [vmem:[%s652] sm:$0x3]
    %655 = vrot.lane.b32.xlu0 %v651, 32
    %v656 = vpop.permute.xlu0 %655
    %v657 = vsel %vm141, %v656, 0
    %659 = vmatprep.subr.mxu0 0.0
    %660 = vmatpush1.msra.mxu0 %v137
    %661 = vmatprep.subr.mxu0 0.0
    %662 = vmatpush1.msra.mxu0 %v138
    %663 = vmatprep.subr.mxu0 0.0
    %664 = vmatpush1.msra.mxu0 %v139
    %665 = vmatprep.subr.mxu0 0.0
    %666 = vmatpush1.msra.mxu0 %v140
    %667 = vmatprep.subr.mxu0 0.0
    %668 = vmatpush1.msra.mxu0 0.0
    %669 = vmatprep.subr.mxu0 0.0
    %670 = vmatpush1.msra.mxu0 0.0
    %671 = vmatprep.subr.mxu0 0.0
    %672 = vmatpush1.msra.mxu0 0.0
    %673 = vmatprep.subr.mxu0 0.0
    %674 = vmatpush1.msra.mxu0 0.0
    %675 = vmatprep.subr.mxu0 0.0
    %676 = vmatpush1.msra.mxu0 0.0
    %677 = vmatprep.subr.mxu0 0.0
    %678 = vmatpush1.msra.mxu0 0.0
    %679 = vmatprep.subr.mxu0 0.0
    %680 = vmatpush1.msra.mxu0 0.0
    %681 = vmatprep.subr.mxu0 0.0
    %682 = vmatpush1.msra.mxu0 0.0
    %683 = vmatprep.subr.mxu0 0.0
    %684 = vmatpush1.msra.mxu0 0.0
    %685 = vmatprep.subr.mxu0 0.0
    %686 = vmatpush1.msra.mxu0 0.0
    %687 = vmatprep.subr.mxu0 0.0
    %688 = vmatpush1.msra.mxu0 0.0
    %689 = vmatprep.subr.mxu0 0.0
    %690 = vmatpush1.msra.mxu0 0.0
    %691 = vmatprep.subr.mxu0 0.0
    %692 = vmatpush1.msra.mxu0 0.0
    %693 = vmatprep.subr.mxu0 0.0
    %694 = vmatpush1.msra.mxu0 0.0
    %695 = vmatprep.subr.mxu0 0.0
    %696 = vmatpush1.msra.mxu0 0.0
    %697 = vmatprep.subr.mxu0 0.0
    %698 = vmatpush1.msra.mxu0 0.0
    %699 = vmatprep.subr.mxu0 0.0
    %700 = vmatpush1.msra.mxu0 0.0
    %701 = vmatprep.subr.mxu0 0.0
    %702 = vmatpush1.msra.mxu0 0.0
    %703 = vmatprep.subr.mxu0 0.0
    %704 = vmatpush1.msra.mxu0 0.0
    %705 = vmatprep.subr.mxu0 0.0
    %706 = vmatpush1.msra.mxu0 0.0
    %707 = vmatprep.subr.mxu0 0.0
    %708 = vmatpush1.msra.mxu0 0.0
    %709 = vmatprep.subr.mxu0 0.0
    %710 = vmatpush1.msra.mxu0 0.0
    %711 = vmatprep.subr.mxu0 0.0
    %712 = vmatpush1.msra.mxu0 0.0
    %713 = vmatprep.subr.mxu0 0.0
    %714 = vmatpush1.msra.mxu0 0.0
    %715 = vmatprep.subr.mxu0 0.0
    %716 = vmatpush1.msra.mxu0 0.0
    %717 = vmatprep.subr.mxu0 0.0
    %718 = vmatpush1.msra.mxu0 0.0
    %719 = vmatprep.subr.mxu0 0.0
    %720 = vmatpush1.msra.mxu0 0.0
    %721 = vmatprep.subr.mxu0 0.0
    %722 = vmatpush1.msra.mxu0 0.0
    %723 = vmatprep.mubr.f32.mxu0 0.0
    %724 = vmatmul.mubr.f32.gmra.mrb[0].mxu0 %v657
    %v725 = vpop.f32.mrb[0].mxu0
    %v726 = vadd.f32 0.0, %v725
    %v727 = vpop.f32.mrb[0].mxu0
    %728 = vdwg.mxu0
    %v729 = vadd.f32 %v653, %v726
    %v730 = vxor.u32 %v729, 2147483648
    %v731 = vmul.f32 %v730, 1.442695
    %v732 = vpow.pop %v731
    %v733 = vadd.f32 %v732, 1.0
    %v734 = vrcp.pop %v733
    %v735 = vmul.f32 1.0, %v734
    %v736 = vtanh.pop %v729
    %v737 = vmul.f32 %v735, %v645
    %739 = vrot.lane.b32.xlu0 %v736, 64
    %v740 = vpop.permute.xlu0 %739
    %v742 = vmul.f32 %v735, %v740
    %744 = vrot.lane.b32.xlu0 %v742, 32
    %v745 = vpop.permute.xlu0 %744
    %v747 = vadd.f32 %v737, %v745
    %v748 = vtanh.pop %v747
    %750 = vrot.lane.b32.xlu0 %v748, 64
    %v751 = vpop.permute.xlu0 %750
    %v753 = vmul.f32 %v735, %v751
    %s754 = scalar_lea.vmem [#allocation2], 12
    %v755 = vld [vmem:[%s754] sm:$0x3]
    %757 = vrot.lane.b32.xlu0 %v753, 32
    %v758 = vpop.permute.xlu0 %757
    %v759 = vsel %vm141, %v758, 0
    %761 = vmatprep.subr.mxu0 0.0
    %762 = vmatpush1.msra.mxu0 %v137
    %763 = vmatprep.subr.mxu0 0.0
    %764 = vmatpush1.msra.mxu0 %v138
    %765 = vmatprep.subr.mxu0 0.0
    %766 = vmatpush1.msra.mxu0 %v139
    %767 = vmatprep.subr.mxu0 0.0
    %768 = vmatpush1.msra.mxu0 %v140
    %769 = vmatprep.subr.mxu0 0.0
    %770 = vmatpush1.msra.mxu0 0.0
    %771 = vmatprep.subr.mxu0 0.0
    %772 = vmatpush1.msra.mxu0 0.0
    %773 = vmatprep.subr.mxu0 0.0
    %774 = vmatpush1.msra.mxu0 0.0
    %775 = vmatprep.subr.mxu0 0.0
    %776 = vmatpush1.msra.mxu0 0.0
    %777 = vmatprep.subr.mxu0 0.0
    %778 = vmatpush1.msra.mxu0 0.0
    %779 = vmatprep.subr.mxu0 0.0
    %780 = vmatpush1.msra.mxu0 0.0
    %781 = vmatprep.subr.mxu0 0.0
    %782 = vmatpush1.msra.mxu0 0.0
    %783 = vmatprep.subr.mxu0 0.0
    %784 = vmatpush1.msra.mxu0 0.0
    %785 = vmatprep.subr.mxu0 0.0
    %786 = vmatpush1.msra.mxu0 0.0
    %787 = vmatprep.subr.mxu0 0.0
    %788 = vmatpush1.msra.mxu0 0.0
    %789 = vmatprep.subr.mxu0 0.0
    %790 = vmatpush1.msra.mxu0 0.0
    %791 = vmatprep.subr.mxu0 0.0
    %792 = vmatpush1.msra.mxu0 0.0
    %793 = vmatprep.subr.mxu0 0.0
    %794 = vmatpush1.msra.mxu0 0.0
    %795 = vmatprep.subr.mxu0 0.0
    %796 = vmatpush1.msra.mxu0 0.0
    %797 = vmatprep.subr.mxu0 0.0
    %798 = vmatpush1.msra.mxu0 0.0
    %799 = vmatprep.subr.mxu0 0.0
    %800 = vmatpush1.msra.mxu0 0.0
    %801 = vmatprep.subr.mxu0 0.0
    %802 = vmatpush1.msra.mxu0 0.0
    %803 = vmatprep.subr.mxu0 0.0
    %804 = vmatpush1.msra.mxu0 0.0
    %805 = vmatprep.subr.mxu0 0.0
    %806 = vmatpush1.msra.mxu0 0.0
    %807 = vmatprep.subr.mxu0 0.0
    %808 = vmatpush1.msra.mxu0 0.0
    %809 = vmatprep.subr.mxu0 0.0
    %810 = vmatpush1.msra.mxu0 0.0
    %811 = vmatprep.subr.mxu0 0.0
    %812 = vmatpush1.msra.mxu0 0.0
    %813 = vmatprep.subr.mxu0 0.0
    %814 = vmatpush1.msra.mxu0 0.0
    %815 = vmatprep.subr.mxu0 0.0
    %816 = vmatpush1.msra.mxu0 0.0
    %817 = vmatprep.subr.mxu0 0.0
    %818 = vmatpush1.msra.mxu0 0.0
    %819 = vmatprep.subr.mxu0 0.0
    %820 = vmatpush1.msra.mxu0 0.0
    %821 = vmatprep.subr.mxu0 0.0
    %822 = vmatpush1.msra.mxu0 0.0
    %823 = vmatprep.subr.mxu0 0.0
    %824 = vmatpush1.msra.mxu0 0.0
    %825 = vmatprep.mubr.f32.mxu0 0.0
    %826 = vmatmul.mubr.f32.gmra.mrb[0].mxu0 %v759
    %v827 = vpop.f32.mrb[0].mxu0
    %v828 = vadd.f32 0.0, %v827
    %v829 = vpop.f32.mrb[0].mxu0
    %830 = vdwg.mxu0
    %v831 = vadd.f32 %v755, %v828
    %v832 = vxor.u32 %v831, 2147483648
    %v833 = vmul.f32 %v832, 1.442695
    %v834 = vpow.pop %v833
    %v835 = vadd.f32 %v834, 1.0
    %v836 = vrcp.pop %v835
    %v837 = vmul.f32 1.0, %v836
    %v838 = vtanh.pop %v831
    %v839 = vmul.f32 %v837, %v747
    %841 = vrot.lane.b32.xlu0 %v838, 64
    %v842 = vpop.permute.xlu0 %841
    %v844 = vmul.f32 %v837, %v842
    %846 = vrot.lane.b32.xlu0 %v844, 32
    %v847 = vpop.permute.xlu0 %846
    %v849 = vadd.f32 %v839, %v847
    %v850 = vtanh.pop %v849
    %852 = vrot.lane.b32.xlu0 %v850, 64
    %v853 = vpop.permute.xlu0 %852
    %v855 = vmul.f32 %v837, %v853
    %s856 = scalar_lea.vmem [#allocation2], 14
    %v857 = vld [vmem:[%s856] sm:$0x3]
    %859 = vrot.lane.b32.xlu0 %v855, 32
    %v860 = vpop.permute.xlu0 %859
    %v861 = vsel %vm141, %v860, 0
    %863 = vmatprep.subr.mxu0 0.0
    %864 = vmatpush1.msra.mxu0 %v137
    %865 = vmatprep.subr.mxu0 0.0
    %866 = vmatpush1.msra.mxu0 %v138
    %867 = vmatprep.subr.mxu0 0.0
    %868 = vmatpush1.msra.mxu0 %v139
    %869 = vmatprep.subr.mxu0 0.0
    %870 = vmatpush1.msra.mxu0 %v140
    %871 = vmatprep.subr.mxu0 0.0
    %872 = vmatpush1.msra.mxu0 0.0
    %873 = vmatprep.subr.mxu0 0.0
    %874 = vmatpush1.msra.mxu0 0.0
    %875 = vmatprep.subr.mxu0 0.0
    %876 = vmatpush1.msra.mxu0 0.0
    %877 = vmatprep.subr.mxu0 0.0
    %878 = vmatpush1.msra.mxu0 0.0
    %879 = vmatprep.subr.mxu0 0.0
    %880 = vmatpush1.msra.mxu0 0.0
    %881 = vmatprep.subr.mxu0 0.0
    %882 = vmatpush1.msra.mxu0 0.0
    %883 = vmatprep.subr.mxu0 0.0
    %884 = vmatpush1.msra.mxu0 0.0
    %885 = vmatprep.subr.mxu0 0.0
    %886 = vmatpush1.msra.mxu0 0.0
    %887 = vmatprep.subr.mxu0 0.0
    %888 = vmatpush1.msra.mxu0 0.0
    %889 = vmatprep.subr.mxu0 0.0
    %890 = vmatpush1.msra.mxu0 0.0
    %891 = vmatprep.subr.mxu0 0.0
    %892 = vmatpush1.msra.mxu0 0.0
    %893 = vmatprep.subr.mxu0 0.0
    %894 = vmatpush1.msra.mxu0 0.0
    %895 = vmatprep.subr.mxu0 0.0
    %896 = vmatpush1.msra.mxu0 0.0
    %897 = vmatprep.subr.mxu0 0.0
    %898 = vmatpush1.msra.mxu0 0.0
    %899 = vmatprep.subr.mxu0 0.0
    %900 = vmatpush1.msra.mxu0 0.0
    %901 = vmatprep.subr.mxu0 0.0
    %902 = vmatpush1.msra.mxu0 0.0
    %903 = vmatprep.subr.mxu0 0.0
    %904 = vmatpush1.msra.mxu0 0.0
    %905 = vmatprep.subr.mxu0 0.0
    %906 = vmatpush1.msra.mxu0 0.0
    %907 = vmatprep.subr.mxu0 0.0
    %908 = vmatpush1.msra.mxu0 0.0
    %909 = vmatprep.subr.mxu0 0.0
    %910 = vmatpush1.msra.mxu0 0.0
    %911 = vmatprep.subr.mxu0 0.0
    %912 = vmatpush1.msra.mxu0 0.0
    %913 = vmatprep.subr.mxu0 0.0
    %914 = vmatpush1.msra.mxu0 0.0
    %915 = vmatprep.subr.mxu0 0.0
    %916 = vmatpush1.msra.mxu0 0.0
    %917 = vmatprep.subr.mxu0 0.0
    %918 = vmatpush1.msra.mxu0 0.0
    %919 = vmatprep.subr.mxu0 0.0
    %920 = vmatpush1.msra.mxu0 0.0
    %921 = vmatprep.subr.mxu0 0.0
    %922 = vmatpush1.msra.mxu0 0.0
    %923 = vmatprep.subr.mxu0 0.0
    %924 = vmatpush1.msra.mxu0 0.0
    %925 = vmatprep.subr.mxu0 0.0
    %926 = vmatpush1.msra.mxu0 0.0
    %927 = vmatprep.mubr.f32.mxu0 0.0
    %928 = vmatmul.mubr.f32.gmra.mrb[0].mxu0 %v861
    %v929 = vpop.f32.mrb[0].mxu0
    %v930 = vadd.f32 0.0, %v929
    %v931 = vpop.f32.mrb[0].mxu0
    %932 = vdwg.mxu0
    %v933 = vadd.f32 %v857, %v930
    %v934 = vxor.u32 %v933, 2147483648
    %v935 = vmul.f32 %v934, 1.442695
    %v936 = vpow.pop %v935
    %v937 = vadd.f32 %v936, 1.0
    %v938 = vrcp.pop %v937
    %v939 = vmul.f32 1.0, %v938
    %v940 = vtanh.pop %v933
    %v941 = vmul.f32 %v939, %v849
    %943 = vrot.lane.b32.xlu0 %v940, 64
    %v944 = vpop.permute.xlu0 %943
    %v946 = vmul.f32 %v939, %v944
    %948 = vrot.lane.b32.xlu0 %v946, 32
    %v949 = vpop.permute.xlu0 %948
    %v951 = vadd.f32 %v941, %v949
    %v952 = vtanh.pop %v951
    %954 = vrot.lane.b32.xlu0 %v952, 64
    %v955 = vpop.permute.xlu0 %954
    %v957 = vmul.f32 %v939, %v955
    %v958 = vld [vmem:[%s6] sm:$0xff]
    %v959 = vld [vmem:[%s6 + $0x8] sm:$0xff]
    %v960 = vld [vmem:[%s6 + $0x10] sm:$0xff]
    %v961 = vld [vmem:[%s6 + $0x18] sm:$0xff]
    %v962 = vld [vmem:[%s7] sm:$0x1]
    %v964 = vlaneseq
    %v965 = vshrl.u32 %v964, 7
    %v966 = vsub.s32 0, %v965
    %v967 = vrot.slane %v962, %v966
    %970 = vrot.lane.b32.xlu0 %v957, 32
    %v971 = vpop.permute.xlu0 %970
    %v972 = vsel %vm141, %v971, 0
    %974 = vmatprep.subr.mxu0 0.0
    %975 = vmatpush1.msra.mxu0 %v958
    %976 = vmatprep.subr.mxu0 0.0
    %977 = vmatpush1.msra.mxu0 %v959
    %978 = vmatprep.subr.mxu0 0.0
    %979 = vmatpush1.msra.mxu0 %v960
    %980 = vmatprep.subr.mxu0 0.0
    %981 = vmatpush1.msra.mxu0 %v961
    %982 = vmatprep.subr.mxu0 0.0
    %983 = vmatpush1.msra.mxu0 0.0
    %984 = vmatprep.subr.mxu0 0.0
    %985 = vmatpush1.msra.mxu0 0.0
    %986 = vmatprep.subr.mxu0 0.0
    %987 = vmatpush1.msra.mxu0 0.0
    %988 = vmatprep.subr.mxu0 0.0
    %989 = vmatpush1.msra.mxu0 0.0
    %990 = vmatprep.subr.mxu0 0.0
    %991 = vmatpush1.msra.mxu0 0.0
    %992 = vmatprep.subr.mxu0 0.0
    %993 = vmatpush1.msra.mxu0 0.0
    %994 = vmatprep.subr.mxu0 0.0
    %995 = vmatpush1.msra.mxu0 0.0
    %996 = vmatprep.subr.mxu0 0.0
    %997 = vmatpush1.msra.mxu0 0.0
    %998 = vmatprep.subr.mxu0 0.0
    %999 = vmatpush1.msra.mxu0 0.0
    %1000 = vmatprep.subr.mxu0 0.0
    %1001 = vmatpush1.msra.mxu0 0.0
    %1002 = vmatprep.subr.mxu0 0.0
    %1003 = vmatpush1.msra.mxu0 0.0
    %1004 = vmatprep.subr.mxu0 0.0
    %1005 = vmatpush1.msra.mxu0 0.0
    %1006 = vmatprep.subr.mxu0 0.0
    %1007 = vmatpush1.msra.mxu0 0.0
    %1008 = vmatprep.subr.mxu0 0.0
    %1009 = vmatpush1.msra.mxu0 0.0
    %1010 = vmatprep.subr.mxu0 0.0
    %1011 = vmatpush1.msra.mxu0 0.0
    %1012 = vmatprep.subr.mxu0 0.0
    %1013 = vmatpush1.msra.mxu0 0.0
    %1014 = vmatprep.subr.mxu0 0.0
    %1015 = vmatpush1.msra.mxu0 0.0
    %1016 = vmatprep.subr.mxu0 0.0
    %1017 = vmatpush1.msra.mxu0 0.0
    %1018 = vmatprep.subr.mxu0 0.0
    %1019 = vmatpush1.msra.mxu0 0.0
    %1020 = vmatprep.subr.mxu0 0.0
    %1021 = vmatpush1.msra.mxu0 0.0
    %1022 = vmatprep.subr.mxu0 0.0
    %1023 = vmatpush1.msra.mxu0 0.0
    %1024 = vmatprep.subr.mxu0 0.0
    %1025 = vmatpush1.msra.mxu0 0.0
    %1026 = vmatprep.subr.mxu0 0.0
    %1027 = vmatpush1.msra.mxu0 0.0
    %1028 = vmatprep.subr.mxu0 0.0
    %1029 = vmatpush1.msra.mxu0 0.0
    %1030 = vmatprep.subr.mxu0 0.0
    %1031 = vmatpush1.msra.mxu0 0.0
    %1032 = vmatprep.subr.mxu0 0.0
    %1033 = vmatpush1.msra.mxu0 0.0
    %1034 = vmatprep.subr.mxu0 0.0
    %1035 = vmatpush1.msra.mxu0 0.0
    %1036 = vmatprep.subr.mxu0 0.0
    %1037 = vmatpush1.msra.mxu0 0.0
    %1038 = vmatprep.mubr.f32.mxu0 0.0
    %1039 = vmatmul.mubr.f32.gmra.mrb[0].mxu0 %v972
    %v1040 = vpop.f32.mrb[0].mxu0
    %v1041 = vadd.f32 %v967, %v1040
    %v1042 = vpop.f32.mrb[0].mxu0
    %1043 = vdwg.mxu0
    %v1044 = vtanh.pop %v1041
    %v1045 = vld [vmem:[%s8] sm:$0xff]
    %v1046 = vld [vmem:[%s8 + $0x8] sm:$0xff]
    %v1047 = vld [vmem:[%s9] sm:$0x1]
    %v1049 = vlaneseq
    %v1050 = vshrl.u32 %v1049, 7
    %v1051 = vsub.s32 0, %v1050
    %v1052 = vrot.slane %v1047, %v1051
    %vm1054 = vcmask 130048
    %v1056 = vsel %vm1054, %v1044, 0
    %1058 = vmatprep.subr.mxu0 0.0
    %1059 = vmatpush1.msra.mxu0 %v1045
    %1060 = vmatprep.subr.mxu0 0.0
    %1061 = vmatpush1.msra.mxu0 %v1046
    %1062 = vmatprep.subr.mxu0 0.0
    %1063 = vmatpush1.msra.mxu0 0.0
    %1064 = vmatprep.subr.mxu0 0.0
    %1065 = vmatpush1.msra.mxu0 0.0
    %1066 = vmatprep.subr.mxu0 0.0
    %1067 = vmatpush1.msra.mxu0 0.0
    %1068 = vmatprep.subr.mxu0 0.0
    %1069 = vmatpush1.msra.mxu0 0.0
    %1070 = vmatprep.subr.mxu0 0.0
    %1071 = vmatpush1.msra.mxu0 0.0
    %1072 = vmatprep.subr.mxu0 0.0
    %1073 = vmatpush1.msra.mxu0 0.0
    %1074 = vmatprep.subr.mxu0 0.0
    %1075 = vmatpush1.msra.mxu0 0.0
    %1076 = vmatprep.subr.mxu0 0.0
    %1077 = vmatpush1.msra.mxu0 0.0
    %1078 = vmatprep.subr.mxu0 0.0
    %1079 = vmatpush1.msra.mxu0 0.0
    %1080 = vmatprep.subr.mxu0 0.0
    %1081 = vmatpush1.msra.mxu0 0.0
    %1082 = vmatprep.subr.mxu0 0.0
    %1083 = vmatpush1.msra.mxu0 0.0
    %1084 = vmatprep.subr.mxu0 0.0
    %1085 = vmatpush1.msra.mxu0 0.0
    %1086 = vmatprep.subr.mxu0 0.0
    %1087 = vmatpush1.msra.mxu0 0.0
    %1088 = vmatprep.subr.mxu0 0.0
    %1089 = vmatpush1.msra.mxu0 0.0
    %1090 = vmatprep.subr.mxu0 0.0
    %1091 = vmatpush1.msra.mxu0 0.0
    %1092 = vmatprep.subr.mxu0 0.0
    %1093 = vmatpush1.msra.mxu0 0.0
    %1094 = vmatprep.subr.mxu0 0.0
    %1095 = vmatpush1.msra.mxu0 0.0
    %1096 = vmatprep.subr.mxu0 0.0
    %1097 = vmatpush1.msra.mxu0 0.0
    %1098 = vmatprep.subr.mxu0 0.0
    %1099 = vmatpush1.msra.mxu0 0.0
    %1100 = vmatprep.subr.mxu0 0.0
    %1101 = vmatpush1.msra.mxu0 0.0
    %1102 = vmatprep.subr.mxu0 0.0
    %1103 = vmatpush1.msra.mxu0 0.0
    %1104 = vmatprep.subr.mxu0 0.0
    %1105 = vmatpush1.msra.mxu0 0.0
    %1106 = vmatprep.subr.mxu0 0.0
    %1107 = vmatpush1.msra.mxu0 0.0
    %1108 = vmatprep.subr.mxu0 0.0
    %1109 = vmatpush1.msra.mxu0 0.0
    %1110 = vmatprep.subr.mxu0 0.0
    %1111 = vmatpush1.msra.mxu0 0.0
    %1112 = vmatprep.subr.mxu0 0.0
    %1113 = vmatpush1.msra.mxu0 0.0
    %1114 = vmatprep.subr.mxu0 0.0
    %1115 = vmatpush1.msra.mxu0 0.0
    %1116 = vmatprep.subr.mxu0 0.0
    %1117 = vmatpush1.msra.mxu0 0.0
    %1118 = vmatprep.subr.mxu0 0.0
    %1119 = vmatpush1.msra.mxu0 0.0
    %1120 = vmatprep.subr.mxu0 0.0
    %1121 = vmatpush1.msra.mxu0 0.0
    %1122 = vmatprep.mubr.f32.mxu0 0.0
    %1123 = vmatmul.mubr.f32.gmra.mrb[0].mxu0 %v1056
    %v1124 = vpop.f32.mrb[0].mxu0
    %v1125 = vadd.f32 %v1052, %v1124
    %v1126 = vpop.f32.mrb[0].mxu0
    %1127 = vdwg.mxu0
    %1128 = vst [vmem:[#allocation3] sm:$0x3] %v1125
    // Predicated region
    $region42: #{tpu_custom_call.1} parent=1 // pred_check
      _
    $region43: #{tpu_custom_call.1} parent=1 // pred_check_branch
      %1130 = sbr.rel (0) target = $region45
    $region44: #{tpu_custom_call.1} parent=1 // pred_region
      %s1132 = ssub.s32 32, 32
      %1133 = vsyncadd [#allocation4], %s1132
      %s1135 = sshll.u32 [#allocation3], 4
      %s1136 = int_to_ptr.vmem [resolvable:$true] %s1135
      %1138 = dma.vmem_to_hbm [thread:$0]  %s1136, 32, %s10, [#allocation4]
    $region45: #{tpu_custom_call.1} parent=1 // pred_fallthru
      _
    // Predicated region
    $region46: #{tpu_custom_call.1} parent=1 // pred_check
      _
    $region47: #{tpu_custom_call.1} parent=1 // pred_check_branch
      %1140 = sbr.rel (0) target = $region49
    $region48: #{tpu_custom_call.1} parent=1 // pred_region
      %1141 = dma.done [#allocation4], 32
    $region49: #{tpu_custom_call.1} parent=1 // pred_fallthru
      _
    %1142 = vsyncpa [#allocation4], 1

</llo_original>
